<compile_context>
chip_gen: v7x
topology: tpu7x:2x2x1
jax: 0.10.0
libtpu: 0.0.40
codegen_flags: <defaults>
</compile_context>

<pallas_src>
import jax
import jax.numpy as jnp
from jax.experimental import pallas as pl
from jax.experimental.pallas import tpu as pltpu


LN_EPS = 1e-5          # nn.LayerNorm default
LEAKY_SLOPE = 0.01     # nn.LeakyReLU default negative_slope


def _round_up(n, m):
    return ((n + m - 1) // m) * m


def _cdiv(a, b):
    return (a + b - 1) // b


def residual_classifier_kernel(
    x_ref,            # (TB, input_dim)        f32
    w1_ref,           # (input_dim, hidden)    f32  (VMEM-resident)
    w2_ref,           # (hidden, hidden)       f32  (VMEM-resident)
    w3_ref,           # (hidden, num_classes)  f32  (VMEM-resident)
    lnp_ref,          # (6, hidden)  f32  rows: b1, g1, be1, b2, g2, be2
    b3_ref,           # (1, num_classes) f32
    o_ref,            # (TB, num_classes) f32
):
    def layernorm(h, gamma, beta):
        mean = jnp.mean(h, axis=-1, keepdims=True)
        centered = h - mean
        var = jnp.mean(centered * centered, axis=-1, keepdims=True)
        inv = jax.lax.rsqrt(var + LN_EPS)          # EUP slot
        return centered * inv * gamma + beta

    def leaky_relu(h):
        return jnp.where(h >= 0, h, LEAKY_SLOPE * h)

    x = x_ref[...]                                 # f32

    # fc1 -> layernorm -> leaky relu   (dropout == identity in eval mode)
    h = jnp.dot(x, w1_ref[...], preferred_element_type=jnp.float32) + lnp_ref[0:1, :]
    h = leaky_relu(layernorm(h, lnp_ref[1:2, :], lnp_ref[2:3, :]))

    # fc2 -> layernorm -> leaky relu
    h = jnp.dot(h, w2_ref[...], preferred_element_type=jnp.float32) + lnp_ref[3:4, :]
    h = leaky_relu(layernorm(h, lnp_ref[4:5, :], lnp_ref[5:6, :]))

    # fc3 -> clamp
    out = jnp.dot(h, w3_ref[...], preferred_element_type=jnp.float32) + b3_ref[...]
    o_ref[...] = jnp.clip(out, -10.0, 10.0).astype(o_ref.dtype)


def pack_params(params):
    """One-time parameter prep (hoisted out of the per-call path)."""
    lnp = jnp.concatenate(
        [params["b1"], params["g1"], params["be1"],
         params["b2"], params["g2"], params["be2"]],
        axis=0,
    ).astype(jnp.float32)
    return (
        params["w1"].astype(jnp.float32),
        params["w2"].astype(jnp.float32),
        params["w3"].astype(jnp.float32),
        lnp,
        params["b3"].astype(jnp.float32),
    )


def residual_classifier_forward(x, packed_params, *, batch_tile=2048):
    """x: (B, input_dim) f32.  packed_params: output of pack_params()."""
    w1, w2, w3, lnp, b3 = packed_params
    B, input_dim = x.shape
    hidden_dim = w1.shape[1]
    num_classes = w3.shape[1]

    # Batch tile: multiple of 8 (f32 sublane packing), large enough to
    # amortize per-grid-step overhead, but keep >=2 grid steps for big
    # batches so v7x can split the parallel axis across its 2 TensorCores.
    tb = min(batch_tile, _round_up(B, 8))
    if B >= 2048 and _cdiv(B, tb) < 2:
        tb = _round_up(_cdiv(B, 2), 8)
    tb = max(tb, 8)

    b_p = _round_up(B, tb)
    x_in = x if b_p == B else jnp.pad(x, ((0, b_p - B), (0, 0)))
    grid = (b_p // tb,)

    # VMEM budget: double-buffered x/out tiles + resident params + f32
    # intermediates, ~2x headroom, floored at 16 MiB, capped at 48 MiB
    # (v7x has only 64 MiB physical VMEM).
    tile_bytes = tb * input_dim * 4 + tb * num_classes * 4
    param_bytes = (input_dim * hidden_dim + hidden_dim * hidden_dim
                   + hidden_dim * num_classes + 6 * hidden_dim + num_classes) * 4
    interm_bytes = 4 * tb * hidden_dim * 4
    vmem_limit = int(min(max(2 * (2 * tile_bytes + 2 * param_bytes + interm_bytes),
                             16 * 1024 * 1024),
                         48 * 1024 * 1024))

    out = pl.pallas_call(
        residual_classifier_kernel,
        out_shape=jax.ShapeDtypeStruct((b_p, num_classes), jnp.float32),
        grid=grid,
        in_specs=[
            pl.BlockSpec((tb, input_dim), lambda i: (i, 0)),          # x: tiled over batch
            pl.BlockSpec((input_dim, hidden_dim), lambda i: (0, 0)),  # weights: VMEM-resident
            pl.BlockSpec((hidden_dim, hidden_dim), lambda i: (0, 0)),
            pl.BlockSpec((hidden_dim, num_classes), lambda i: (0, 0)),
            pl.BlockSpec((6, hidden_dim), lambda i: (0, 0)),          # packed LN/bias params
            pl.BlockSpec((1, num_classes), lambda i: (0, 0)),
        ],
        out_specs=pl.BlockSpec((tb, num_classes), lambda i: (i, 0)),
        compiler_params=pltpu.CompilerParams(
            dimension_semantics=("parallel",),                        # megacore on v7x
            vmem_limit_bytes=vmem_limit,
        ),
    )(x_in, w1, w2, w3, lnp, b3)

    return out if b_p == B else out[:B]


def init_params(key, input_dim, hidden_dim, num_classes):
    """Deterministic synthetic init. Linear weights stored as (in, out)."""
    ks = jax.random.split(key, 6)

    def linear(kw, kb, fan_in, fan_out):
        bound = 1.0 / jnp.sqrt(fan_in)
        w = jax.random.uniform(kw, (fan_in, fan_out), jnp.float32, -bound, bound)
        b = jax.random.uniform(kb, (1, fan_out), jnp.float32, -bound, bound)
        return w, b

    w1, b1 = linear(ks[0], ks[1], input_dim, hidden_dim)
    w2, b2 = linear(ks[2], ks[3], hidden_dim, hidden_dim)
    w3, b3 = linear(ks[4], ks[5], hidden_dim, num_classes)

    return {
        "w1": w1, "b1": b1,
        "g1": jnp.ones((1, hidden_dim), jnp.float32),
        "be1": jnp.zeros((1, hidden_dim), jnp.float32),
        "w2": w2, "b2": b2,
        "g2": jnp.ones((1, hidden_dim), jnp.float32),
        "be2": jnp.zeros((1, hidden_dim), jnp.float32),
        "w3": w3, "b3": b3,
    }


def reference_forward(x, p):
    """Pure-JAX f32 reference mirroring the PyTorch module (eval mode)."""

    def ln(h, g, b):
        m = jnp.mean(h, -1, keepdims=True)
        c = h - m
        v = jnp.mean(c * c, -1, keepdims=True)
        return c * jax.lax.rsqrt(v + LN_EPS) * g + b

    def lrelu(h):
        return jnp.where(h >= 0, h, LEAKY_SLOPE * h)

    def dot(a, w):
        return jnp.dot(a, w, precision=jax.lax.Precision.HIGHEST,
                       preferred_element_type=jnp.float32)

    h = lrelu(ln(dot(x, p["w1"]) + p["b1"], p["g1"], p["be1"]))
    h = lrelu(ln(dot(h, p["w2"]) + p["b2"], p["g2"], p["be2"]))
    out = dot(h, p["w3"]) + p["b3"]
    return jnp.clip(out, -10.0, 10.0)


if __name__ == "__main__":
    B, INPUT_DIM, HIDDEN_DIM, NUM_CLASSES = 8, 32, 64, 16

    key = jax.random.PRNGKey(0)
    k_x, k_p = jax.random.split(key)
    x = jax.random.normal(k_x, (B, INPUT_DIM), jnp.float32)
    params = init_params(k_p, INPUT_DIM, HIDDEN_DIM, NUM_CLASSES)
    packed = pack_params(params)     # one-time param prep (not per forward)

    out = jax.block_until_ready(residual_classifier_forward(x, packed))
    assert out.shape == (B, NUM_CLASSES)

    # All-f32 kernel math: check against the f32 reference.  Tolerance leaves
    # headroom for MXU f32-pass decomposition differences vs Precision.HIGHEST.
    ref = reference_forward(x, params)
    assert jnp.allclose(out, ref, atol=1e-2, rtol=1e-2), "mismatch vs f32 reference"

    print("KERNEL_OK")
</pallas_src>

<mosaic_0001>
module attributes {stable_mosaic.version = 11 : i64} {
  func.func @residual_classifier_kernel(%arg0: i32, %arg1: memref<8x32xf32, #tpu.memory_space<vmem>>, %arg2: memref<32x64xf32, #tpu.memory_space<vmem>>, %arg3: memref<64x64xf32, #tpu.memory_space<vmem>>, %arg4: memref<64x16xf32, #tpu.memory_space<vmem>>, %arg5: memref<6x64xf32, #tpu.memory_space<vmem>>, %arg6: memref<1x16xf32, #tpu.memory_space<vmem>>, %arg7: memref<8x16xf32, #tpu.memory_space<vmem>>) attributes {dimension_semantics = [#tpu.dimension_semantics<parallel>], iteration_bounds = array<i64: 1>, scalar_prefetch = 0 : i64, scratch_operands = 0 : i64, tpu.core_type = #tpu.core_type<tc>, window_params = [{transform_indices = @transform_0, window_bounds = array<i64: 8, 32>}, {pipeline_mode = #tpu.pipeline_mode<synchronous>, transform_indices = @transform_1, window_bounds = array<i64: 32, 64>}, {pipeline_mode = #tpu.pipeline_mode<synchronous>, transform_indices = @transform_2, window_bounds = array<i64: 64, 64>}, {pipeline_mode = #tpu.pipeline_mode<synchronous>, transform_indices = @transform_3, window_bounds = array<i64: 64, 16>}, {pipeline_mode = #tpu.pipeline_mode<synchronous>, transform_indices = @transform_4, window_bounds = array<i64: 6, 64>}, {pipeline_mode = #tpu.pipeline_mode<synchronous>, transform_indices = @transform_5, window_bounds = array<i64: 1, 16>}, {transform_indices = @transform_6, window_bounds = array<i64: 8, 16>}]} {
    %c0 = arith.constant 0 : index
    %c0_0 = arith.constant 0 : index
    %0 = vector.load %arg1[%c0, %c0_0] : memref<8x32xf32, #tpu.memory_space<vmem>>, vector<8x32xf32>
    %c0_1 = arith.constant 0 : index
    %c0_2 = arith.constant 0 : index
    %1 = vector.load %arg2[%c0_1, %c0_2] : memref<32x64xf32, #tpu.memory_space<vmem>>, vector<32x64xf32>
    %cst = arith.constant dense<0.000000e+00> : vector<8x64xf32>
    %2 = tpu.matmul %0, %1, %cst {dimension_numbers = #tpu.dot_dimension_numbers<[1], [0], [0], [1], [0, 0, 1, 1], [], []>} : vector<8x32xf32>, vector<32x64xf32>, vector<8x64xf32> -> vector<8x64xf32>
    %c0_3 = arith.constant 0 : index
    %c0_4 = arith.constant 0 : index
    %3 = vector.load %arg5[%c0_3, %c0_4] : memref<6x64xf32, #tpu.memory_space<vmem>>, vector<1x64xf32>
    %4 = vector.broadcast %3 : vector<1x64xf32> to vector<8x64xf32>
    %5 = arith.addf %2, %4 : vector<8x64xf32>
    %c1 = arith.constant 1 : index
    %c0_5 = arith.constant 0 : index
    %6 = vector.load %arg5[%c1, %c0_5] : memref<6x64xf32, #tpu.memory_space<vmem>>, vector<1x64xf32>
    %c2 = arith.constant 2 : index
    %c0_6 = arith.constant 0 : index
    %7 = vector.load %arg5[%c2, %c0_6] : memref<6x64xf32, #tpu.memory_space<vmem>>, vector<1x64xf32>
    %cst_7 = arith.constant dense<0.000000e+00> : vector<8xf32>
    %8 = vector.multi_reduction <add>, %5, %cst_7 [1] : vector<8x64xf32> to vector<8xf32>
    %9 = vector.shape_cast %8 : vector<8xf32> to vector<8x1xf32>
    %cst_8 = arith.constant 6.400000e+01 : f32
    %10 = vector.broadcast %cst_8 : f32 to vector<8x1xf32>
    %11 = arith.divf %9, %10 : vector<8x1xf32>
    %12 = vector.broadcast %11 : vector<8x1xf32> to vector<8x64xf32>
    %13 = arith.subf %5, %12 : vector<8x64xf32>
    %14 = arith.mulf %13, %13 : vector<8x64xf32>
    %cst_9 = arith.constant dense<0.000000e+00> : vector<8xf32>
    %15 = vector.multi_reduction <add>, %14, %cst_9 [1] : vector<8x64xf32> to vector<8xf32>
    %16 = vector.shape_cast %15 : vector<8xf32> to vector<8x1xf32>
    %cst_10 = arith.constant 6.400000e+01 : f32
    %17 = vector.broadcast %cst_10 : f32 to vector<8x1xf32>
    %18 = arith.divf %16, %17 : vector<8x1xf32>
    %cst_11 = arith.constant 9.99999974E-6 : f32
    %19 = vector.broadcast %cst_11 : f32 to vector<8x1xf32>
    %20 = arith.addf %18, %19 : vector<8x1xf32>
    %21 = math.rsqrt %20 : vector<8x1xf32>
    %22 = vector.broadcast %21 : vector<8x1xf32> to vector<8x64xf32>
    %23 = arith.mulf %13, %22 : vector<8x64xf32>
    %24 = vector.broadcast %6 : vector<1x64xf32> to vector<8x64xf32>
    %25 = arith.mulf %23, %24 : vector<8x64xf32>
    %26 = vector.broadcast %7 : vector<1x64xf32> to vector<8x64xf32>
    %27 = arith.addf %25, %26 : vector<8x64xf32>
    %cst_12 = arith.constant 0.000000e+00 : f32
    %28 = vector.broadcast %cst_12 : f32 to vector<8x64xf32>
    %29 = arith.cmpf oge, %27, %28 : vector<8x64xf32>
    %cst_13 = arith.constant 0.00999999977 : f32
    %30 = vector.broadcast %cst_13 : f32 to vector<8x64xf32>
    %31 = arith.mulf %30, %27 : vector<8x64xf32>
    %32 = arith.select %29, %27, %31 : vector<8x64xi1>, vector<8x64xf32>
    %c0_14 = arith.constant 0 : index
    %c0_15 = arith.constant 0 : index
    %33 = vector.load %arg3[%c0_14, %c0_15] : memref<64x64xf32, #tpu.memory_space<vmem>>, vector<64x64xf32>
    %cst_16 = arith.constant dense<0.000000e+00> : vector<8x64xf32>
    %34 = tpu.matmul %32, %33, %cst_16 {dimension_numbers = #tpu.dot_dimension_numbers<[1], [0], [0], [1], [0, 0, 1, 1], [], []>} : vector<8x64xf32>, vector<64x64xf32>, vector<8x64xf32> -> vector<8x64xf32>
    %c3 = arith.constant 3 : index
    %c0_17 = arith.constant 0 : index
    %35 = vector.load %arg5[%c3, %c0_17] : memref<6x64xf32, #tpu.memory_space<vmem>>, vector<1x64xf32>
    %36 = vector.broadcast %35 : vector<1x64xf32> to vector<8x64xf32>
    %37 = arith.addf %34, %36 : vector<8x64xf32>
    %c4 = arith.constant 4 : index
    %c0_18 = arith.constant 0 : index
    %38 = vector.load %arg5[%c4, %c0_18] : memref<6x64xf32, #tpu.memory_space<vmem>>, vector<1x64xf32>
    %c5 = arith.constant 5 : index
    %c0_19 = arith.constant 0 : index
    %39 = vector.load %arg5[%c5, %c0_19] : memref<6x64xf32, #tpu.memory_space<vmem>>, vector<1x64xf32>
    %cst_20 = arith.constant dense<0.000000e+00> : vector<8xf32>
    %40 = vector.multi_reduction <add>, %37, %cst_20 [1] : vector<8x64xf32> to vector<8xf32>
    %41 = vector.shape_cast %40 : vector<8xf32> to vector<8x1xf32>
    %cst_21 = arith.constant 6.400000e+01 : f32
    %42 = vector.broadcast %cst_21 : f32 to vector<8x1xf32>
    %43 = arith.divf %41, %42 : vector<8x1xf32>
    %44 = vector.broadcast %43 : vector<8x1xf32> to vector<8x64xf32>
    %45 = arith.subf %37, %44 : vector<8x64xf32>
    %46 = arith.mulf %45, %45 : vector<8x64xf32>
    %cst_22 = arith.constant dense<0.000000e+00> : vector<8xf32>
    %47 = vector.multi_reduction <add>, %46, %cst_22 [1] : vector<8x64xf32> to vector<8xf32>
    %48 = vector.shape_cast %47 : vector<8xf32> to vector<8x1xf32>
    %cst_23 = arith.constant 6.400000e+01 : f32
    %49 = vector.broadcast %cst_23 : f32 to vector<8x1xf32>
    %50 = arith.divf %48, %49 : vector<8x1xf32>
    %cst_24 = arith.constant 9.99999974E-6 : f32
    %51 = vector.broadcast %cst_24 : f32 to vector<8x1xf32>
    %52 = arith.addf %50, %51 : vector<8x1xf32>
    %53 = math.rsqrt %52 : vector<8x1xf32>
    %54 = vector.broadcast %53 : vector<8x1xf32> to vector<8x64xf32>
    %55 = arith.mulf %45, %54 : vector<8x64xf32>
    %56 = vector.broadcast %38 : vector<1x64xf32> to vector<8x64xf32>
    %57 = arith.mulf %55, %56 : vector<8x64xf32>
    %58 = vector.broadcast %39 : vector<1x64xf32> to vector<8x64xf32>
    %59 = arith.addf %57, %58 : vector<8x64xf32>
    %cst_25 = arith.constant 0.000000e+00 : f32
    %60 = vector.broadcast %cst_25 : f32 to vector<8x64xf32>
    %61 = arith.cmpf oge, %59, %60 : vector<8x64xf32>
    %cst_26 = arith.constant 0.00999999977 : f32
    %62 = vector.broadcast %cst_26 : f32 to vector<8x64xf32>
    %63 = arith.mulf %62, %59 : vector<8x64xf32>
    %64 = arith.select %61, %59, %63 : vector<8x64xi1>, vector<8x64xf32>
    %c0_27 = arith.constant 0 : index
    %c0_28 = arith.constant 0 : index
    %65 = vector.load %arg4[%c0_27, %c0_28] : memref<64x16xf32, #tpu.memory_space<vmem>>, vector<64x16xf32>
    %cst_29 = arith.constant dense<0.000000e+00> : vector<8x16xf32>
    %66 = tpu.matmul %64, %65, %cst_29 {dimension_numbers = #tpu.dot_dimension_numbers<[1], [0], [0], [1], [0, 0, 1, 1], [], []>} : vector<8x64xf32>, vector<64x16xf32>, vector<8x16xf32> -> vector<8x16xf32>
    %c0_30 = arith.constant 0 : index
    %c0_31 = arith.constant 0 : index
    %67 = vector.load %arg6[%c0_30, %c0_31] : memref<1x16xf32, #tpu.memory_space<vmem>>, vector<1x16xf32>
    %68 = vector.broadcast %67 : vector<1x16xf32> to vector<8x16xf32>
    %69 = arith.addf %66, %68 : vector<8x16xf32>
    %cst_32 = arith.constant -1.000000e+01 : f32
    %cst_33 = arith.constant 1.000000e+01 : f32
    %70 = vector.broadcast %cst_32 : f32 to vector<8x16xf32>
    %71 = arith.maximumf %70, %69 : vector<8x16xf32>
    %72 = vector.broadcast %cst_33 : f32 to vector<8x16xf32>
    %73 = arith.minimumf %72, %71 : vector<8x16xf32>
    %c0_34 = arith.constant 0 : index
    %c0_35 = arith.constant 0 : index
    %74 = vector.load %arg7[%c0_34, %c0_35] : memref<8x16xf32, #tpu.memory_space<vmem>>, vector<8x16xf32>
    tpu.vector_store %arg7[%c0_34, %c0_35], %73 {strides = array<i32>} : memref<8x16xf32, #tpu.memory_space<vmem>>, vector<8x16xf32>,
    return
  }
  func.func @transform_0(%arg0: i32) -> (i32, i32) {
    %c0_i32 = arith.constant 0 : i32
    %c0_i32_0 = arith.constant 0 : i32
    return %arg0, %c0_i32 : i32, i32
  }
  func.func @transform_1(%arg0: i32) -> (i32, i32) {
    %c0_i32 = arith.constant 0 : i32
    %c0_i32_0 = arith.constant 0 : i32
    %c0_i32_1 = arith.constant 0 : i32
    return %c0_i32, %c0_i32_0 : i32, i32
  }
  func.func @transform_2(%arg0: i32) -> (i32, i32) {
    %c0_i32 = arith.constant 0 : i32
    %c0_i32_0 = arith.constant 0 : i32
    %c0_i32_1 = arith.constant 0 : i32
    return %c0_i32, %c0_i32_0 : i32, i32
  }
  func.func @transform_3(%arg0: i32) -> (i32, i32) {
    %c0_i32 = arith.constant 0 : i32
    %c0_i32_0 = arith.constant 0 : i32
    %c0_i32_1 = arith.constant 0 : i32
    return %c0_i32, %c0_i32_0 : i32, i32
  }
  func.func @transform_4(%arg0: i32) -> (i32, i32) {
    %c0_i32 = arith.constant 0 : i32
    %c0_i32_0 = arith.constant 0 : i32
    %c0_i32_1 = arith.constant 0 : i32
    return %c0_i32, %c0_i32_0 : i32, i32
  }
  func.func @transform_5(%arg0: i32) -> (i32, i32) {
    %c0_i32 = arith.constant 0 : i32
    %c0_i32_0 = arith.constant 0 : i32
    %c0_i32_1 = arith.constant 0 : i32
    return %c0_i32, %c0_i32_0 : i32, i32
  }
  func.func @transform_6(%arg0: i32) -> (i32, i32) {
    %c0_i32 = arith.constant 0 : i32
    %c0_i32_0 = arith.constant 0 : i32
    return %arg0, %c0_i32 : i32, i32
  }
}

</mosaic_0001>

<llo_original>
// kernel: tpu_custom_call.1
$region0: #{tpu_custom_call.1}
  #allocation0 [shape = 'u32[]', space=smem, size = 0x4, offset = 0x4, fixed_abs, tag = 'smem constant byte address 0x4 - core index']
  #allocation1 [shape = 'u32[144,128]{1,0:T(1,128)}', space=vmem, size = 0x12000, scoped, tag = 'internal scratch']
  %s0 = inlined_call_operand.vmem [shape: f32[8,32], index: 0, kind: input, shape index: {}]
  %s1 = inlined_call_operand.hbm [shape: f32[32,64], index: 1, kind: input, shape index: {}]
  %s2 = inlined_call_operand.vmem [shape: f32[64,64], index: 2, kind: input, shape index: {}]
  %s3 = inlined_call_operand.vmem [shape: f32[64,16], index: 3, kind: input, shape index: {}]
  %s4 = inlined_call_operand.vmem [shape: f32[6,64], index: 4, kind: input, shape index: {}]
  %s5 = inlined_call_operand.vmem [shape: f32[1,16], index: 5, kind: input, shape index: {}]
  %s6 = inlined_call_operand.hbm [shape: f32[8,16], index: 6, kind: output, shape index: {}]
  %s7 = sld [smem:[#allocation0]]
  $region38: #{tpu_custom_call.1} parent=0
    _
  %s9 = ssub.s32 1, %s7
  %s10 = scalar_select 0, %s9, %s7
  $region1: #{tpu_custom_call.1} parent=0
    #allocation2 [shape = 'u8[16384]{0}', space=vmem, size = 0x4000, scoped, tag = 'input window, operand 1, single buffered']
    #allocation3 [shape = 's32[1]{0}', space=sflag, size = 0x4, scoped, tag = 'scoped memory for tpu_custom_call.1']
    #allocation4 [shape = 's32[1]{0}', space=sflag, size = 0x4, scoped, tag = 'scoped memory for tpu_custom_call.1']
    #allocation5 [shape = 'u8[4096]{0}', space=vmem, size = 0x1000, scoped, tag = 'output window, operand 0, single buffered']
    %11 = vsyncpa [#allocation3], 0
    %12 = vsyncpa [#allocation4], 0
    // Predicated region
    $region2: #{tpu_custom_call.1} parent=1 // pred_check
      _
    $region3: #{tpu_custom_call.1} parent=1 // pred_check_branch
      %14 = sbr.rel (0) target = $region5
    $region4: #{tpu_custom_call.1} parent=1 // pred_region
      _
    $region5: #{tpu_custom_call.1} parent=1 // pred_fallthru
      _
    // Predicated region
    $region6: #{tpu_custom_call.1} parent=1 // pred_check
      _
    $region7: #{tpu_custom_call.1} parent=1 // pred_check_branch
      %16 = sbr.rel (0) target = $region9
    $region8: #{tpu_custom_call.1} parent=1 // pred_region
      %s18 = ssub.s32 512, 512
      %19 = vsyncadd [#allocation3], %s18
      %s20 = sshll.u32 [#allocation2], 4
      %s21 = int_to_ptr.vmem [resolvable:$true] %s20
      %26 = dma.hbm_to_vmem [thread:$0]  %s1, 512, %s21, [#allocation3], 128, 128, 8
    $region9: #{tpu_custom_call.1} parent=1 // pred_fallthru
      _
    // Predicated region
    $region10: #{tpu_custom_call.1} parent=1 // pred_check
      _
    $region11: #{tpu_custom_call.1} parent=1 // pred_check_branch
      %28 = sbr.rel (0) target = $region13
    $region12: #{tpu_custom_call.1} parent=1 // pred_region
      _
    $region13: #{tpu_custom_call.1} parent=1 // pred_fallthru
      _
    // Predicated region
    $region14: #{tpu_custom_call.1} parent=1 // pred_check
      _
    $region15: #{tpu_custom_call.1} parent=1 // pred_check_branch
      %30 = sbr.rel (0) target = $region17
    $region16: #{tpu_custom_call.1} parent=1 // pred_region
      _
    $region17: #{tpu_custom_call.1} parent=1 // pred_fallthru
      _
    // Predicated region
    $region18: #{tpu_custom_call.1} parent=1 // pred_check
      _
    $region19: #{tpu_custom_call.1} parent=1 // pred_check_branch
      %32 = sbr.rel (0) target = $region21
    $region20: #{tpu_custom_call.1} parent=1 // pred_region
      _
    $region21: #{tpu_custom_call.1} parent=1 // pred_fallthru
      _
    // Predicated region
    $region22: #{tpu_custom_call.1} parent=1 // pred_check
      _
    $region23: #{tpu_custom_call.1} parent=1 // pred_check_branch
      %34 = sbr.rel (0) target = $region25
    $region24: #{tpu_custom_call.1} parent=1 // pred_region
      _
    $region25: #{tpu_custom_call.1} parent=1 // pred_fallthru
      _
    // Predicated region
    $region26: #{tpu_custom_call.1} parent=1 // pred_check
      _
    $region27: #{tpu_custom_call.1} parent=1 // pred_check_branch
      %36 = sbr.rel (0) target = $region29
    $region28: #{tpu_custom_call.1} parent=1 // pred_region
      %37 = dma.done [#allocation3], 512
    $region29: #{tpu_custom_call.1} parent=1 // pred_fallthru
      _
    %v38 = vld [vmem:[%s0] sm:$0xff]
    %v39 = vld [vmem:[#allocation2] sm:$0xff]
    %v40 = vld [vmem:[#allocation2 + $0x8] sm:$0xff]
    %v41 = vld [vmem:[#allocation2 + $0x10] sm:$0xff]
    %v42 = vld [vmem:[#allocation2 + $0x18] sm:$0xff]
    %v43 = vld [vmem:[%s4] sm:$0x1]
    %v44 = vlaneseq
    %v45 = vshrl.u32 %v44, 7
    %v46 = vsub.s32 0, %v45
    %v47 = vrot.slane %v43, %v46
    %vm48 = vcmask 261120
    %v50 = vsel %vm48, %v38, 0
    %52 = vmatprep.subr.mxu0 0.0
    %53 = vmatpush1.msra.mxu0 %v39
    %54 = vmatprep.subr.mxu0 0.0
    %55 = vmatpush1.msra.mxu0 %v40
    %56 = vmatprep.subr.mxu0 0.0
    %57 = vmatpush1.msra.mxu0 %v41
    %58 = vmatprep.subr.mxu0 0.0
    %59 = vmatpush1.msra.mxu0 %v42
    %60 = vmatprep.subr.mxu0 0.0
    %61 = vmatpush1.msra.mxu0 0.0
    %62 = vmatprep.subr.mxu0 0.0
    %63 = vmatpush1.msra.mxu0 0.0
    %64 = vmatprep.subr.mxu0 0.0
    %65 = vmatpush1.msra.mxu0 0.0
    %66 = vmatprep.subr.mxu0 0.0
    %67 = vmatpush1.msra.mxu0 0.0
    %68 = vmatprep.subr.mxu0 0.0
    %69 = vmatpush1.msra.mxu0 0.0
    %70 = vmatprep.subr.mxu0 0.0
    %71 = vmatpush1.msra.mxu0 0.0
    %72 = vmatprep.subr.mxu0 0.0
    %73 = vmatpush1.msra.mxu0 0.0
    %74 = vmatprep.subr.mxu0 0.0
    %75 = vmatpush1.msra.mxu0 0.0
    %76 = vmatprep.subr.mxu0 0.0
    %77 = vmatpush1.msra.mxu0 0.0
    %78 = vmatprep.subr.mxu0 0.0
    %79 = vmatpush1.msra.mxu0 0.0
    %80 = vmatprep.subr.mxu0 0.0
    %81 = vmatpush1.msra.mxu0 0.0
    %82 = vmatprep.subr.mxu0 0.0
    %83 = vmatpush1.msra.mxu0 0.0
    %84 = vmatprep.subr.mxu0 0.0
    %85 = vmatpush1.msra.mxu0 0.0
    %86 = vmatprep.subr.mxu0 0.0
    %87 = vmatpush1.msra.mxu0 0.0
    %88 = vmatprep.subr.mxu0 0.0
    %89 = vmatpush1.msra.mxu0 0.0
    %90 = vmatprep.subr.mxu0 0.0
    %91 = vmatpush1.msra.mxu0 0.0
    %92 = vmatprep.subr.mxu0 0.0
    %93 = vmatpush1.msra.mxu0 0.0
    %94 = vmatprep.subr.mxu0 0.0
    %95 = vmatpush1.msra.mxu0 0.0
    %96 = vmatprep.subr.mxu0 0.0
    %97 = vmatpush1.msra.mxu0 0.0
    %98 = vmatprep.subr.mxu0 0.0
    %99 = vmatpush1.msra.mxu0 0.0
    %100 = vmatprep.subr.mxu0 0.0
    %101 = vmatpush1.msra.mxu0 0.0
    %102 = vmatprep.subr.mxu0 0.0
    %103 = vmatpush1.msra.mxu0 0.0
    %104 = vmatprep.subr.mxu0 0.0
    %105 = vmatpush1.msra.mxu0 0.0
    %106 = vmatprep.subr.mxu0 0.0
    %107 = vmatpush1.msra.mxu0 0.0
    %108 = vmatprep.subr.mxu0 0.0
    %109 = vmatpush1.msra.mxu0 0.0
    %110 = vmatprep.subr.mxu0 0.0
    %111 = vmatpush1.msra.mxu0 0.0
    %112 = vmatprep.subr.mxu0 0.0
    %113 = vmatpush1.msra.mxu0 0.0
    %114 = vmatprep.subr.mxu0 0.0
    %115 = vmatpush1.msra.mxu0 0.0
    %116 = vmatprep.mubr.f32.mxu0 0.0
    %117 = vmatmul.mubr.f32.gmra.mrb[0].mxu0 %v50
    %v118 = vpop.f32.mrb[0].mxu0
    %v119 = vadd.f32 %v47, %v118
    %v120 = vpop.f32.mrb[0].mxu0
    %121 = vdwg.mxu0
    %v122 = vld [vmem:[%s4 + $0x1] sm:$0x1]
    %v123 = vld [vmem:[%s4 + $0x2] sm:$0x1]
    %vm124 = vcmask 523264
    %v125 = vsel %vm124, %v119, 0.0
    %126 = vadd.xlane.f32.xlu0 %v125
    %v127 = vpop.xlane.xlu0 %126
    %v128 = vrcp.pop 64.0
    %v129 = vmul.f32 %v127, %v128
    %v130 = vsub.f32 %v119, %v129
    %v131 = vmul.f32 %v130, %v130
    %v132 = vsel %vm124, %v131, 0.0
    %133 = vadd.xlane.f32.xlu0 %v132
    %v134 = vpop.xlane.xlu0 %133
    %v135 = vmul.f32 %v134, %v128
    %v136 = vadd.f32 %v135, 1e-05
    %v137 = vrsqrt.pop %v136
    %v138 = vmul.f32 %v130, %v137
    %v139 = vlaneseq
    %v140 = vshrl.u32 %v139, 7
    %v141 = vsub.s32 0, %v140
    %v142 = vrot.slane %v122, %v141
    %v143 = vmul.f32 %v138, %v142
    %v144 = vlaneseq
    %v145 = vshrl.u32 %v144, 7
    %v146 = vsub.s32 0, %v145
    %v147 = vrot.slane %v123, %v146
    %v148 = vadd.f32 %v143, %v147
    %vm149 = vcmp.ge.f32.partialorder %v148, 0.0
    %v150 = vmul.f32 %v148, 0.01
    %v151 = vsel %vm149, %v148, %v150
    %v152 = vld [vmem:[%s2] sm:$0xff]
    %v153 = vld [vmem:[%s2 + $0x8] sm:$0xff]
    %v154 = vld [vmem:[%s2 + $0x10] sm:$0xff]
    %v155 = vld [vmem:[%s2 + $0x18] sm:$0xff]
    %v156 = vld [vmem:[%s2 + $0x20] sm:$0xff]
    %v157 = vld [vmem:[%s2 + $0x28] sm:$0xff]
    %v158 = vld [vmem:[%s2 + $0x30] sm:$0xff]
    %v159 = vld [vmem:[%s2 + $0x38] sm:$0xff]
    %v160 = vld [vmem:[%s4 + $0x3] sm:$0x1]
    %v161 = vlaneseq
    %v162 = vshrl.u32 %v161, 7
    %v163 = vsub.s32 0, %v162
    %v164 = vrot.slane %v160, %v163
    %v166 = vsel %vm124, %v151, 0
    %168 = vmatprep.subr.mxu0 0.0
    %169 = vmatpush1.msra.mxu0 %v152
    %170 = vmatprep.subr.mxu0 0.0
    %171 = vmatpush1.msra.mxu0 %v153
    %172 = vmatprep.subr.mxu0 0.0
    %173 = vmatpush1.msra.mxu0 %v154
    %174 = vmatprep.subr.mxu0 0.0
    %175 = vmatpush1.msra.mxu0 %v155
    %176 = vmatprep.subr.mxu0 0.0
    %177 = vmatpush1.msra.mxu0 %v156
    %178 = vmatprep.subr.mxu0 0.0
    %179 = vmatpush1.msra.mxu0 %v157
    %180 = vmatprep.subr.mxu0 0.0
    %181 = vmatpush1.msra.mxu0 %v158
    %182 = vmatprep.subr.mxu0 0.0
    %183 = vmatpush1.msra.mxu0 %v159
    %184 = vmatprep.subr.mxu0 0.0
    %185 = vmatpush1.msra.mxu0 0.0
    %186 = vmatprep.subr.mxu0 0.0
    %187 = vmatpush1.msra.mxu0 0.0
    %188 = vmatprep.subr.mxu0 0.0
    %189 = vmatpush1.msra.mxu0 0.0
    %190 = vmatprep.subr.mxu0 0.0
    %191 = vmatpush1.msra.mxu0 0.0
    %192 = vmatprep.subr.mxu0 0.0
    %193 = vmatpush1.msra.mxu0 0.0
    %194 = vmatprep.subr.mxu0 0.0
    %195 = vmatpush1.msra.mxu0 0.0
    %196 = vmatprep.subr.mxu0 0.0
    %197 = vmatpush1.msra.mxu0 0.0
    %198 = vmatprep.subr.mxu0 0.0
    %199 = vmatpush1.msra.mxu0 0.0
    %200 = vmatprep.subr.mxu0 0.0
    %201 = vmatpush1.msra.mxu0 0.0
    %202 = vmatprep.subr.mxu0 0.0
    %203 = vmatpush1.msra.mxu0 0.0
    %204 = vmatprep.subr.mxu0 0.0
    %205 = vmatpush1.msra.mxu0 0.0
    %206 = vmatprep.subr.mxu0 0.0
    %207 = vmatpush1.msra.mxu0 0.0
    %208 = vmatprep.subr.mxu0 0.0
    %209 = vmatpush1.msra.mxu0 0.0
    %210 = vmatprep.subr.mxu0 0.0
    %211 = vmatpush1.msra.mxu0 0.0
    %212 = vmatprep.subr.mxu0 0.0
    %213 = vmatpush1.msra.mxu0 0.0
    %214 = vmatprep.subr.mxu0 0.0
    %215 = vmatpush1.msra.mxu0 0.0
    %216 = vmatprep.subr.mxu0 0.0
    %217 = vmatpush1.msra.mxu0 0.0
    %218 = vmatprep.subr.mxu0 0.0
    %219 = vmatpush1.msra.mxu0 0.0
    %220 = vmatprep.subr.mxu0 0.0
    %221 = vmatpush1.msra.mxu0 0.0
    %222 = vmatprep.subr.mxu0 0.0
    %223 = vmatpush1.msra.mxu0 0.0
    %224 = vmatprep.subr.mxu0 0.0
    %225 = vmatpush1.msra.mxu0 0.0
    %226 = vmatprep.subr.mxu0 0.0
    %227 = vmatpush1.msra.mxu0 0.0
    %228 = vmatprep.subr.mxu0 0.0
    %229 = vmatpush1.msra.mxu0 0.0
    %230 = vmatprep.subr.mxu0 0.0
    %231 = vmatpush1.msra.mxu0 0.0
    %232 = vmatprep.mubr.f32.mxu0 0.0
    %233 = vmatmul.mubr.f32.gmra.mrb[0].mxu0 %v166
    %v234 = vpop.f32.mrb[0].mxu0
    %v235 = vadd.f32 %v164, %v234
    %v236 = vpop.f32.mrb[0].mxu0
    %237 = vdwg.mxu0
    %v238 = vld [vmem:[%s4 + $0x4] sm:$0x1]
    %v239 = vld [vmem:[%s4 + $0x5] sm:$0x1]
    %v240 = vsel %vm124, %v235, 0.0
    %241 = vadd.xlane.f32.xlu0 %v240
    %v242 = vpop.xlane.xlu0 %241
    %v243 = vmul.f32 %v242, %v128
    %v244 = vsub.f32 %v235, %v243
    %v245 = vmul.f32 %v244, %v244
    %v246 = vsel %vm124, %v245, 0.0
    %247 = vadd.xlane.f32.xlu0 %v246
    %v248 = vpop.xlane.xlu0 %247
    %v249 = vmul.f32 %v248, %v128
    %v250 = vadd.f32 %v249, 1e-05
    %v251 = vrsqrt.pop %v250
    %v252 = vmul.f32 %v244, %v251
    %v253 = vlaneseq
    %v254 = vshrl.u32 %v253, 7
    %v255 = vsub.s32 0, %v254
    %v256 = vrot.slane %v238, %v255
    %v257 = vmul.f32 %v252, %v256
    %v258 = vlaneseq
    %v259 = vshrl.u32 %v258, 7
    %v260 = vsub.s32 0, %v259
    %v261 = vrot.slane %v239, %v260
    %v262 = vadd.f32 %v257, %v261
    %vm263 = vcmp.ge.f32.partialorder %v262, 0.0
    %v264 = vmul.f32 %v262, 0.01
    %v265 = vsel %vm263, %v262, %v264
    %v266 = vld [vmem:[%s3] sm:$0xff]
    %v267 = vld [vmem:[%s3 + $0x8] sm:$0xff]
    %v268 = vld [vmem:[%s3 + $0x10] sm:$0xff]
    %v269 = vld [vmem:[%s3 + $0x18] sm:$0xff]
    %v270 = vld [vmem:[%s3 + $0x20] sm:$0xff]
    %v271 = vld [vmem:[%s3 + $0x28] sm:$0xff]
    %v272 = vld [vmem:[%s3 + $0x30] sm:$0xff]
    %v273 = vld [vmem:[%s3 + $0x38] sm:$0xff]
    %v274 = vld [vmem:[%s5] sm:$0x1]
    %v276 = vlaneseq
    %v277 = vshrl.u32 %v276, 7
    %v278 = vsub.s32 0, %v277
    %v279 = vrot.slane %v274, %v278
    %v282 = vsel %vm124, %v265, 0
    %284 = vmatprep.subr.mxu0 0.0
    %285 = vmatpush1.msra.mxu0 %v266
    %286 = vmatprep.subr.mxu0 0.0
    %287 = vmatpush1.msra.mxu0 %v267
    %288 = vmatprep.subr.mxu0 0.0
    %289 = vmatpush1.msra.mxu0 %v268
    %290 = vmatprep.subr.mxu0 0.0
    %291 = vmatpush1.msra.mxu0 %v269
    %292 = vmatprep.subr.mxu0 0.0
    %293 = vmatpush1.msra.mxu0 %v270
    %294 = vmatprep.subr.mxu0 0.0
    %295 = vmatpush1.msra.mxu0 %v271
    %296 = vmatprep.subr.mxu0 0.0
    %297 = vmatpush1.msra.mxu0 %v272
    %298 = vmatprep.subr.mxu0 0.0
    %299 = vmatpush1.msra.mxu0 %v273
    %300 = vmatprep.subr.mxu0 0.0
    %301 = vmatpush1.msra.mxu0 0.0
    %302 = vmatprep.subr.mxu0 0.0
    %303 = vmatpush1.msra.mxu0 0.0
    %304 = vmatprep.subr.mxu0 0.0
    %305 = vmatpush1.msra.mxu0 0.0
    %306 = vmatprep.subr.mxu0 0.0
    %307 = vmatpush1.msra.mxu0 0.0
    %308 = vmatprep.subr.mxu0 0.0
    %309 = vmatpush1.msra.mxu0 0.0
    %310 = vmatprep.subr.mxu0 0.0
    %311 = vmatpush1.msra.mxu0 0.0
    %312 = vmatprep.subr.mxu0 0.0
    %313 = vmatpush1.msra.mxu0 0.0
    %314 = vmatprep.subr.mxu0 0.0
    %315 = vmatpush1.msra.mxu0 0.0
    %316 = vmatprep.subr.mxu0 0.0
    %317 = vmatpush1.msra.mxu0 0.0
    %318 = vmatprep.subr.mxu0 0.0
    %319 = vmatpush1.msra.mxu0 0.0
    %320 = vmatprep.subr.mxu0 0.0
    %321 = vmatpush1.msra.mxu0 0.0
    %322 = vmatprep.subr.mxu0 0.0
    %323 = vmatpush1.msra.mxu0 0.0
    %324 = vmatprep.subr.mxu0 0.0
    %325 = vmatpush1.msra.mxu0 0.0
    %326 = vmatprep.subr.mxu0 0.0
    %327 = vmatpush1.msra.mxu0 0.0
    %328 = vmatprep.subr.mxu0 0.0
    %329 = vmatpush1.msra.mxu0 0.0
    %330 = vmatprep.subr.mxu0 0.0
    %331 = vmatpush1.msra.mxu0 0.0
    %332 = vmatprep.subr.mxu0 0.0
    %333 = vmatpush1.msra.mxu0 0.0
    %334 = vmatprep.subr.mxu0 0.0
    %335 = vmatpush1.msra.mxu0 0.0
    %336 = vmatprep.subr.mxu0 0.0
    %337 = vmatpush1.msra.mxu0 0.0
    %338 = vmatprep.subr.mxu0 0.0
    %339 = vmatpush1.msra.mxu0 0.0
    %340 = vmatprep.subr.mxu0 0.0
    %341 = vmatpush1.msra.mxu0 0.0
    %342 = vmatprep.subr.mxu0 0.0
    %343 = vmatpush1.msra.mxu0 0.0
    %344 = vmatprep.subr.mxu0 0.0
    %345 = vmatpush1.msra.mxu0 0.0
    %346 = vmatprep.subr.mxu0 0.0
    %347 = vmatpush1.msra.mxu0 0.0
    %348 = vmatprep.mubr.f32.mxu0 0.0
    %349 = vmatmul.mubr.f32.gmra.mrb[0].mxu0 %v282
    %v350 = vpop.f32.mrb[0].mxu0
    %v351 = vadd.f32 %v279, %v350
    %v352 = vpop.f32.mrb[0].mxu0
    %353 = vdwg.mxu0
    %v354 = vmax.f32 %v351, -10.0
    %v355 = vmin.f32 %v354, 10.0
    %vm356 = vcmask 130048
    %357 = vst.msk [vmem:[#allocation5] sm:$0xff] %vm356, %v355
    // Predicated region
    $region30: #{tpu_custom_call.1} parent=1 // pred_check
      _
    $region31: #{tpu_custom_call.1} parent=1 // pred_check_branch
      %359 = sbr.rel (0) target = $region33
    $region32: #{tpu_custom_call.1} parent=1 // pred_region
      %s361 = ssub.s32 128, 128
      %362 = vsyncadd [#allocation4], %s361
      %s364 = sshll.u32 [#allocation5], 4
      %s365 = int_to_ptr.vmem [resolvable:$true] %s364
      %367 = dma.vmem_to_hbm [thread:$0]  %s365, 128, %s6, [#allocation4]
    $region33: #{tpu_custom_call.1} parent=1 // pred_fallthru
      _
    // Predicated region
    $region34: #{tpu_custom_call.1} parent=1 // pred_check
      _
    $region35: #{tpu_custom_call.1} parent=1 // pred_check_branch
      %369 = sbr.rel (0) target = $region37
    $region36: #{tpu_custom_call.1} parent=1 // pred_region
      %370 = dma.done [#allocation4], 128
    $region37: #{tpu_custom_call.1} parent=1 // pred_fallthru
      _
    %371 = vsyncpa [#allocation3], 1
    %372 = vsyncpa [#allocation4], 1

</llo_original>
